<compile_context>
chip_gen: v5e
topology: v5e:2x2
jax: 0.10.0
libtpu: 0.0.40
codegen_flags: <defaults>
</compile_context>

<pallas_src>
import functools

import jax
import jax.numpy as jnp
from jax.experimental import pallas as pl
from jax.experimental.pallas import tpu as pltpu

INPUT_SIZE = 4
HIDDEN_SIZES = 10
OUTPUT_SIZE = 2

# Below this batch the fused-XLA reference beats a custom-call launch.
# Review item: re-measure this crossover after the tiling/transpose changes; kept conservative.
_PALLAS_MIN_BATCH = 4096


@functools.lru_cache(maxsize=1)
def _tpu_config():
    """Per-generation (batch_tile_lanes, vmem_limit_bytes, use_bf16_activations)."""
    kind = ""
    try:
        kind = jax.devices()[0].device_kind.lower()
    except Exception:  # unknown backend / interpret mode
        pass
    if "v7" in kind or "7x" in kind:
        # v7x: 64 MiB physical VMEM (32 MiB default scoped), 2 TCs -> keep tiles modest so the
        # batch grid has >=2 steps and the "parallel" axis can feed both TensorCores.
        return 32_768, 48 * 1024 * 1024, True
    if "v6" in kind:
        # v6e: 128 MiB VMEM; big tiles amortize per-grid-step overhead.
        return 65_536, 64 * 1024 * 1024, True
    if "v5" in kind:
        # v5e: lowest HBM bandwidth, 16 MiB default scoped VMEM; no bf16 VPU/EUP path.
        return 16_384, 32 * 1024 * 1024, False
    # Unknown generation: conservative defaults, f32 activations.
    return 32_768, None, False


def _sigmoid(z):
    # sigmoid(z) == 0.5*tanh(0.5*z) + 0.5 : a single EUP push per element (vs exp + divide).
    return 0.5 * jnp.tanh(0.5 * z) + 0.5


def _make_kernel(act_dtype):
    def kernel(x_ref, w1_ref, b1_ref, w2_ref, b2_ref, w3_ref, b3_ref, o_ref):
        x = x_ref[...]                                               # [IN, TB] f32
        # Layer 1: [H, IN] @ [IN, TB] -> [H, TB].
        # NOTE (review, gated on bundle evidence): if MXU push cadence ever binds, this tiny
        # [10,4]@[4,TB] dot can be replaced by 4 sublane-broadcast VPU FMAs; not applied here.
        h = jnp.dot(w1_ref[...], x, preferred_element_type=jnp.float32)
        h = _sigmoid((h + b1_ref[...]).astype(act_dtype))
        # Layer 2: [H, H] @ [H, TB] -> [H, TB]  (bf16 x bf16 -> f32 accum when enabled).
        h = jnp.dot(w2_ref[...], h, preferred_element_type=jnp.float32)
        h = _sigmoid((h + b2_ref[...]).astype(act_dtype))
        # Layer 3: [OUT, H] @ [H, TB] -> [OUT, TB]; lane-dense output slab (unmasked stores).
        h = jnp.dot(w3_ref[...], h, preferred_element_type=jnp.float32)
        o_ref[...] = _sigmoid(h + b3_ref[...]).astype(o_ref.dtype)

    return kernel


def discriminator_pallas_t(x_t, params, *, block_b=None, vmem_limit_bytes=None, bf16_acts=None):
    """Transposed layout fast path: x_t [INPUT_SIZE, B] -> out [OUTPUT_SIZE, B].

    Zero wrapper-side HBM transpose passes; use this when the producer keeps activations
    batch-on-lane (e.g. a training loop calling the discriminator repeatedly).
    """
    cfg_tb, cfg_vmem, cfg_bf16 = _tpu_config()
    tb_cap = cfg_tb if block_b is None else block_b
    if vmem_limit_bytes is None:
        vmem_limit_bytes = cfg_vmem
    if bf16_acts is None:
        bf16_acts = cfg_bf16
    act_dtype = jnp.bfloat16 if bf16_acts else jnp.float32

    w1, b1 = params["w1"], params["b1"]
    w2, b2 = params["w2"], params["b2"]
    w3, b3 = params["w3"], params["b3"]
    if bf16_acts:
        # bf16 activations feed bf16 weights -> MXU-native bf16 dots; accumulation stays f32.
        w2 = w2.astype(jnp.bfloat16)
        w3 = w3.astype(jnp.bfloat16)

    in_dim, B = x_t.shape
    assert in_dim == INPUT_SIZE

    # Single full-array block for small B (any B allowed, lane-sparse but correct); otherwise
    # 128-multiple lane tiles; the last partial block is clipped by Pallas.
    tb = B if B <= tb_cap else tb_cap
    grid = (pl.cdiv(B, tb),)

    def resident(arr):
        # Tiny weight/bias blocks: full array, constant index -> VMEM-resident across the grid.
        # (pl.Buffered(1) on these specs was considered (review item); <1% effect, skipped to
        #  keep the call maximally portable across jax versions.)
        return pl.BlockSpec(arr.shape, lambda i: (0, 0))

    param_bytes = sum(int(a.size) * a.dtype.itemsize for a in (w1, b1, w2, b2, w3, b3))
    cost = pl.CostEstimate(
        flops=2 * B * (INPUT_SIZE * HIDDEN_SIZES
                       + HIDDEN_SIZES * HIDDEN_SIZES
                       + HIDDEN_SIZES * OUTPUT_SIZE),
        transcendentals=B * (2 * HIDDEN_SIZES + OUTPUT_SIZE),
        bytes_accessed=4 * B * (INPUT_SIZE + OUTPUT_SIZE) + param_bytes,
    )

    return pl.pallas_call(
        _make_kernel(act_dtype),
        out_shape=jax.ShapeDtypeStruct((OUTPUT_SIZE, B), jnp.float32),
        grid=grid,
        in_specs=[
            pl.BlockSpec((INPUT_SIZE, tb), lambda i: (0, i)),
            resident(w1), resident(b1),
            resident(w2), resident(b2),
            resident(w3), resident(b3),
        ],
        out_specs=pl.BlockSpec((OUTPUT_SIZE, tb), lambda i: (0, i)),
        compiler_params=pltpu.CompilerParams(
            dimension_semantics=("parallel",),   # batch tiles are independent (v7x: both TCs)
            vmem_limit_bytes=vmem_limit_bytes,
        ),
        cost_estimate=cost,
    )(x_t, w1, b1, w2, b2, w3, b3)


def discriminator_pallas(x, params, *, block_b=None, vmem_limit_bytes=None, bf16_acts=None):
    """Torch layout: x [B, INPUT_SIZE] -> [B, OUTPUT_SIZE].

    The two jnp.transpose calls are separate HBM passes that cannot fuse through the custom
    call; callers doing repeated discriminator evaluations should keep activations in the
    transposed layout and use discriminator_pallas_t directly (review item).
    """
    out_t = discriminator_pallas_t(
        jnp.transpose(x), params,
        block_b=block_b, vmem_limit_bytes=vmem_limit_bytes, bf16_acts=bf16_acts)
    return jnp.transpose(out_t)


def discriminator_forward(x, params, *, block_b=None, force_pallas=False):
    """Dispatch: tiny batches go through fused XLA (cheaper than a custom-call launch)."""
    B = x.shape[0]
    if not force_pallas and B < _PALLAS_MIN_BATCH:
        return reference_forward(x, params)
    return discriminator_pallas(x, params, block_b=block_b)


def reference_forward(x, params):
    """Pure-JAX reference, identical math (weights [out, in], biases [out, 1])."""
    h = jax.nn.sigmoid(x @ params["w1"].T + params["b1"].T)
    h = jax.nn.sigmoid(h @ params["w2"].T + params["b2"].T)
    return jax.nn.sigmoid(h @ params["w3"].T + params["b3"].T)


def init_params(key):
    """torch.nn.Linear-style init: uniform +/- 1/sqrt(fan_in); weights [out, in], biases [out, 1]
    (bias column-vectors broadcast along the lane/batch axis inside the kernel)."""
    ks = jax.random.split(key, 6)

    def linear(kw, kb, fan_in, fan_out):
        bound = 1.0 / jnp.sqrt(fan_in)
        w = jax.random.uniform(kw, (fan_out, fan_in), jnp.float32, -bound, bound)
        b = jax.random.uniform(kb, (fan_out, 1), jnp.float32, -bound, bound)
        return w, b

    w1, b1 = linear(ks[0], ks[1], INPUT_SIZE, HIDDEN_SIZES)
    w2, b2 = linear(ks[2], ks[3], HIDDEN_SIZES, HIDDEN_SIZES)
    w3, b3 = linear(ks[4], ks[5], HIDDEN_SIZES, OUTPUT_SIZE)
    return dict(w1=w1, b1=b1, w2=w2, b2=b2, w3=w3, b3=b3)


if __name__ == "__main__":
    key = jax.random.PRNGKey(0)
    k1, k2, k3, kp = jax.random.split(key, 4)
    params = init_params(kp)

    # Tolerance depends on whether this generation enables bf16 activations (v6e/v7x).
    _, _, bf16_default = _tpu_config()
    tol = dict(atol=2e-2, rtol=2e-2) if bf16_default else dict(atol=1e-5, rtol=1e-5)

    # --- Test 1: small batch forced through Pallas (single full-array block) ---
    B1 = 8
    x1 = jax.random.normal(k1, (B1, INPUT_SIZE), dtype=jnp.float32)
    out1 = jax.block_until_ready(discriminator_forward(x1, params, force_pallas=True))
    ref1 = reference_forward(x1, params)
    assert out1.shape == (B1, OUTPUT_SIZE)
    assert jnp.allclose(out1, ref1, **tol)

    # --- Test 2: multi-tile grid with a partial last block (pipelined path) ---
    B2 = 1000
    x2 = jax.random.normal(k2, (B2, INPUT_SIZE), dtype=jnp.float32)
    out2 = jax.block_until_ready(discriminator_pallas(x2, params, block_b=256))  # 4 grid steps
    ref2 = reference_forward(x2, params)
    assert out2.shape == (B2, OUTPUT_SIZE)
    assert jnp.allclose(out2, ref2, **tol)

    # --- Test 3: transposed (zero wrapper-transpose) entry point ---
    B3 = 512
    x3 = jax.random.normal(k3, (B3, INPUT_SIZE), dtype=jnp.float32)
    out3_t = jax.block_until_ready(
        discriminator_pallas_t(jnp.transpose(x3), params, block_b=256))
    ref3 = reference_forward(x3, params)
    assert out3_t.shape == (OUTPUT_SIZE, B3)
    assert jnp.allclose(jnp.transpose(out3_t), ref3, **tol)

    print("KERNEL_OK")
</pallas_src>

<mosaic_0001>
module attributes {stable_mosaic.version = 11 : i64} {
  func.func @kernel(%arg0: i32, %arg1: memref<4x8xf32, #tpu.memory_space<vmem>>, %arg2: memref<10x4xf32, #tpu.memory_space<vmem>>, %arg3: memref<10x1xf32, #tpu.memory_space<vmem>>, %arg4: memref<10x10xf32, #tpu.memory_space<vmem>>, %arg5: memref<10x1xf32, #tpu.memory_space<vmem>>, %arg6: memref<2x10xf32, #tpu.memory_space<vmem>>, %arg7: memref<2x1xf32, #tpu.memory_space<vmem>>, %arg8: memref<2x8xf32, #tpu.memory_space<vmem>>) attributes {dimension_semantics = [#tpu.dimension_semantics<parallel>], iteration_bounds = array<i64: 1>, scalar_prefetch = 0 : i64, scratch_operands = 0 : i64, tpu.core_type = #tpu.core_type<tc>, window_params = [{transform_indices = @transform_0, window_bounds = array<i64: 4, 8>}, {pipeline_mode = #tpu.pipeline_mode<synchronous>, transform_indices = @transform_1, window_bounds = array<i64: 10, 4>}, {pipeline_mode = #tpu.pipeline_mode<synchronous>, transform_indices = @transform_2, window_bounds = array<i64: 10, 1>}, {pipeline_mode = #tpu.pipeline_mode<synchronous>, transform_indices = @transform_3, window_bounds = array<i64: 10, 10>}, {pipeline_mode = #tpu.pipeline_mode<synchronous>, transform_indices = @transform_4, window_bounds = array<i64: 10, 1>}, {pipeline_mode = #tpu.pipeline_mode<synchronous>, transform_indices = @transform_5, window_bounds = array<i64: 2, 10>}, {pipeline_mode = #tpu.pipeline_mode<synchronous>, transform_indices = @transform_6, window_bounds = array<i64: 2, 1>}, {transform_indices = @transform_7, window_bounds = array<i64: 2, 8>}]} {
    %c0 = arith.constant 0 : index
    %c0_0 = arith.constant 0 : index
    %0 = vector.load %arg1[%c0, %c0_0] : memref<4x8xf32, #tpu.memory_space<vmem>>, vector<4x8xf32>
    %c0_1 = arith.constant 0 : index
    %c0_2 = arith.constant 0 : index
    %1 = vector.load %arg2[%c0_1, %c0_2] : memref<10x4xf32, #tpu.memory_space<vmem>>, vector<10x4xf32>
    %cst = arith.constant dense<0.000000e+00> : vector<10x8xf32>
    %2 = tpu.matmul %1, %0, %cst {dimension_numbers = #tpu.dot_dimension_numbers<[1], [0], [0], [1], [0, 0, 1, 1], [], []>} : vector<10x4xf32>, vector<4x8xf32>, vector<10x8xf32> -> vector<10x8xf32>
    %c0_3 = arith.constant 0 : index
    %c0_4 = arith.constant 0 : index
    %3 = vector.load %arg3[%c0_3, %c0_4] : memref<10x1xf32, #tpu.memory_space<vmem>>, vector<10x1xf32>
    %4 = vector.broadcast %3 : vector<10x1xf32> to vector<10x8xf32>
    %5 = arith.addf %2, %4 : vector<10x8xf32>
    %cst_5 = arith.constant 5.000000e-01 : f32
    %6 = vector.broadcast %cst_5 : f32 to vector<10x8xf32>
    %7 = arith.mulf %6, %5 : vector<10x8xf32>
    %8 = math.tanh %7 : vector<10x8xf32>
    %cst_6 = arith.constant 5.000000e-01 : f32
    %9 = vector.broadcast %cst_6 : f32 to vector<10x8xf32>
    %10 = arith.mulf %9, %8 : vector<10x8xf32>
    %cst_7 = arith.constant 5.000000e-01 : f32
    %11 = vector.broadcast %cst_7 : f32 to vector<10x8xf32>
    %12 = arith.addf %10, %11 : vector<10x8xf32>
    %c0_8 = arith.constant 0 : index
    %c0_9 = arith.constant 0 : index
    %13 = vector.load %arg4[%c0_8, %c0_9] : memref<10x10xf32, #tpu.memory_space<vmem>>, vector<10x10xf32>
    %cst_10 = arith.constant dense<0.000000e+00> : vector<10x8xf32>
    %14 = tpu.matmul %13, %12, %cst_10 {dimension_numbers = #tpu.dot_dimension_numbers<[1], [0], [0], [1], [0, 0, 1, 1], [], []>} : vector<10x10xf32>, vector<10x8xf32>, vector<10x8xf32> -> vector<10x8xf32>
    %c0_11 = arith.constant 0 : index
    %c0_12 = arith.constant 0 : index
    %15 = vector.load %arg5[%c0_11, %c0_12] : memref<10x1xf32, #tpu.memory_space<vmem>>, vector<10x1xf32>
    %16 = vector.broadcast %15 : vector<10x1xf32> to vector<10x8xf32>
    %17 = arith.addf %14, %16 : vector<10x8xf32>
    %cst_13 = arith.constant 5.000000e-01 : f32
    %18 = vector.broadcast %cst_13 : f32 to vector<10x8xf32>
    %19 = arith.mulf %18, %17 : vector<10x8xf32>
    %20 = math.tanh %19 : vector<10x8xf32>
    %cst_14 = arith.constant 5.000000e-01 : f32
    %21 = vector.broadcast %cst_14 : f32 to vector<10x8xf32>
    %22 = arith.mulf %21, %20 : vector<10x8xf32>
    %cst_15 = arith.constant 5.000000e-01 : f32
    %23 = vector.broadcast %cst_15 : f32 to vector<10x8xf32>
    %24 = arith.addf %22, %23 : vector<10x8xf32>
    %c0_16 = arith.constant 0 : index
    %c0_17 = arith.constant 0 : index
    %25 = vector.load %arg6[%c0_16, %c0_17] : memref<2x10xf32, #tpu.memory_space<vmem>>, vector<2x10xf32>
    %cst_18 = arith.constant dense<0.000000e+00> : vector<2x8xf32>
    %26 = tpu.matmul %25, %24, %cst_18 {dimension_numbers = #tpu.dot_dimension_numbers<[1], [0], [0], [1], [0, 0, 1, 1], [], []>} : vector<2x10xf32>, vector<10x8xf32>, vector<2x8xf32> -> vector<2x8xf32>
    %c0_19 = arith.constant 0 : index
    %c0_20 = arith.constant 0 : index
    %27 = vector.load %arg7[%c0_19, %c0_20] : memref<2x1xf32, #tpu.memory_space<vmem>>, vector<2x1xf32>
    %28 = vector.broadcast %27 : vector<2x1xf32> to vector<2x8xf32>
    %29 = arith.addf %26, %28 : vector<2x8xf32>
    %cst_21 = arith.constant 5.000000e-01 : f32
    %30 = vector.broadcast %cst_21 : f32 to vector<2x8xf32>
    %31 = arith.mulf %30, %29 : vector<2x8xf32>
    %32 = math.tanh %31 : vector<2x8xf32>
    %cst_22 = arith.constant 5.000000e-01 : f32
    %33 = vector.broadcast %cst_22 : f32 to vector<2x8xf32>
    %34 = arith.mulf %33, %32 : vector<2x8xf32>
    %cst_23 = arith.constant 5.000000e-01 : f32
    %35 = vector.broadcast %cst_23 : f32 to vector<2x8xf32>
    %36 = arith.addf %34, %35 : vector<2x8xf32>
    %c0_24 = arith.constant 0 : index
    %c0_25 = arith.constant 0 : index
    %37 = vector.load %arg8[%c0_24, %c0_25] : memref<2x8xf32, #tpu.memory_space<vmem>>, vector<2x8xf32>
    tpu.vector_store %arg8[%c0_24, %c0_25], %36 {strides = array<i32>} : memref<2x8xf32, #tpu.memory_space<vmem>>, vector<2x8xf32>,
    return
  }
  func.func @transform_0(%arg0: i32) -> (i32, i32) {
    %c0_i32 = arith.constant 0 : i32
    %c0_i32_0 = arith.constant 0 : i32
    return %c0_i32, %arg0 : i32, i32
  }
  func.func @transform_1(%arg0: i32) -> (i32, i32) {
    %c0_i32 = arith.constant 0 : i32
    %c0_i32_0 = arith.constant 0 : i32
    %c0_i32_1 = arith.constant 0 : i32
    return %c0_i32, %c0_i32_0 : i32, i32
  }
  func.func @transform_2(%arg0: i32) -> (i32, i32) {
    %c0_i32 = arith.constant 0 : i32
    %c0_i32_0 = arith.constant 0 : i32
    %c0_i32_1 = arith.constant 0 : i32
    return %c0_i32, %c0_i32_0 : i32, i32
  }
  func.func @transform_3(%arg0: i32) -> (i32, i32) {
    %c0_i32 = arith.constant 0 : i32
    %c0_i32_0 = arith.constant 0 : i32
    %c0_i32_1 = arith.constant 0 : i32
    return %c0_i32, %c0_i32_0 : i32, i32
  }
  func.func @transform_4(%arg0: i32) -> (i32, i32) {
    %c0_i32 = arith.constant 0 : i32
    %c0_i32_0 = arith.constant 0 : i32
    %c0_i32_1 = arith.constant 0 : i32
    return %c0_i32, %c0_i32_0 : i32, i32
  }
  func.func @transform_5(%arg0: i32) -> (i32, i32) {
    %c0_i32 = arith.constant 0 : i32
    %c0_i32_0 = arith.constant 0 : i32
    %c0_i32_1 = arith.constant 0 : i32
    return %c0_i32, %c0_i32_0 : i32, i32
  }
  func.func @transform_6(%arg0: i32) -> (i32, i32) {
    %c0_i32 = arith.constant 0 : i32
    %c0_i32_0 = arith.constant 0 : i32
    %c0_i32_1 = arith.constant 0 : i32
    return %c0_i32, %c0_i32_0 : i32, i32
  }
  func.func @transform_7(%arg0: i32) -> (i32, i32) {
    %c0_i32 = arith.constant 0 : i32
    %c0_i32_0 = arith.constant 0 : i32
    return %c0_i32, %arg0 : i32, i32
  }
}

</mosaic_0001>

<llo_original>
// kernel: tpu_custom_call.1
$region0: #{tpu_custom_call.1}
  #allocation0 [shape = 'u32[]', space=smem, size = 0x4, offset = 0x4, fixed_abs, tag = 'smem constant byte address 0x4 - core index']
  #allocation1 [shape = 'u32[72,128]{1,0:T(1,128)}', space=vmem, size = 0x9000, scoped, tag = 'internal scratch']
  %s0 = inlined_call_operand.vmem [shape: f32[4,8], index: 0, kind: input, shape index: {}]
  %s1 = inlined_call_operand.vmem [shape: f32[10,4], index: 1, kind: input, shape index: {}]
  %s2 = inlined_call_operand.vmem [shape: f32[10,1], index: 2, kind: input, shape index: {}]
  %s3 = inlined_call_operand.vmem [shape: f32[10,10], index: 3, kind: input, shape index: {}]
  %s4 = inlined_call_operand.vmem [shape: f32[10,1], index: 4, kind: input, shape index: {}]
  %s5 = inlined_call_operand.vmem [shape: f32[2,10], index: 5, kind: input, shape index: {}]
  %s6 = inlined_call_operand.vmem [shape: f32[2,1], index: 6, kind: input, shape index: {}]
  %s7 = inlined_call_operand.hbm [shape: f32[2,8], index: 7, kind: output, shape index: {}]
  %s8 = sld [smem:[#allocation0]]
  $region38: #{tpu_custom_call.1} parent=0
    _
  %s10 = ssub.s32 1, %s8
  %s11 = scalar_select 0, %s10, %s8
  $region1: #{tpu_custom_call.1} parent=0
    #allocation2 [shape = 'u8[1024]{0}', space=vmem, size = 0x400, scoped, tag = 'output window, operand 0, single buffered']
    #allocation3 [shape = 's32[1]{0}', space=sflag, size = 0x4, scoped, tag = 'scoped memory for tpu_custom_call.1']
    %12 = vsyncpa [#allocation3], 0
    // Predicated region
    $region2: #{tpu_custom_call.1} parent=1 // pred_check
      _
    $region3: #{tpu_custom_call.1} parent=1 // pred_check_branch
      %14 = sbr.rel (0) target = $region5
    $region4: #{tpu_custom_call.1} parent=1 // pred_region
      _
    $region5: #{tpu_custom_call.1} parent=1 // pred_fallthru
      _
    // Predicated region
    $region6: #{tpu_custom_call.1} parent=1 // pred_check
      _
    $region7: #{tpu_custom_call.1} parent=1 // pred_check_branch
      %16 = sbr.rel (0) target = $region9
    $region8: #{tpu_custom_call.1} parent=1 // pred_region
      _
    $region9: #{tpu_custom_call.1} parent=1 // pred_fallthru
      _
    // Predicated region
    $region10: #{tpu_custom_call.1} parent=1 // pred_check
      _
    $region11: #{tpu_custom_call.1} parent=1 // pred_check_branch
      %18 = sbr.rel (0) target = $region13
    $region12: #{tpu_custom_call.1} parent=1 // pred_region
      _
    $region13: #{tpu_custom_call.1} parent=1 // pred_fallthru
      _
    // Predicated region
    $region14: #{tpu_custom_call.1} parent=1 // pred_check
      _
    $region15: #{tpu_custom_call.1} parent=1 // pred_check_branch
      %20 = sbr.rel (0) target = $region17
    $region16: #{tpu_custom_call.1} parent=1 // pred_region
      _
    $region17: #{tpu_custom_call.1} parent=1 // pred_fallthru
      _
    // Predicated region
    $region18: #{tpu_custom_call.1} parent=1 // pred_check
      _
    $region19: #{tpu_custom_call.1} parent=1 // pred_check_branch
      %22 = sbr.rel (0) target = $region21
    $region20: #{tpu_custom_call.1} parent=1 // pred_region
      _
    $region21: #{tpu_custom_call.1} parent=1 // pred_fallthru
      _
    // Predicated region
    $region22: #{tpu_custom_call.1} parent=1 // pred_check
      _
    $region23: #{tpu_custom_call.1} parent=1 // pred_check_branch
      %24 = sbr.rel (0) target = $region25
    $region24: #{tpu_custom_call.1} parent=1 // pred_region
      _
    $region25: #{tpu_custom_call.1} parent=1 // pred_fallthru
      _
    // Predicated region
    $region26: #{tpu_custom_call.1} parent=1 // pred_check
      _
    $region27: #{tpu_custom_call.1} parent=1 // pred_check_branch
      %26 = sbr.rel (0) target = $region29
    $region28: #{tpu_custom_call.1} parent=1 // pred_region
      _
    $region29: #{tpu_custom_call.1} parent=1 // pred_fallthru
      _
    %v27 = vld [vmem:[%s0] sm:$0xf]
    %v28 = vld [vmem:[%s1] sm:$0xff]
    %v29 = vld [vmem:[%s1 + $0x8] sm:$0x3]
    %v30 = vld [vmem:[%s2] sm:$0xff]
    %v31 = vld [vmem:[%s2 + $0x8] sm:$0x3]
    %33 = vset.pattern.permute.xlu0 0
    %34 = vperm.xlu0 %33, %v30
    %v35 = vpop.permute.xlu0 %34
    %38 = vset.pattern.permute.xlu0 0
    %39 = vperm.xlu0 %38, %v31
    %v40 = vpop.permute.xlu0 %39
    %vm42 = vcmask 31744
    %v44 = vsel %vm42, %v28, 0
    %v47 = vsel %vm42, %v29, 0
    %vm49 = vcmask 1043456
    %v51 = vsel %vm49, %v27, 0
    %53 = vmatpush.msra.mxu0 0.0
    %54 = vmatpush.msra.mxu0 0.0
    %55 = vmatpush.msra.mxu0 0.0
    %56 = vmatpush.msra.mxu0 0.0
    %57 = vmatpush.msra.mxu0 0.0
    %58 = vmatpush.msra.mxu0 0.0
    %59 = vmatpush.msra.mxu0 0.0
    %60 = vmatpush.msra.mxu0 0.0
    %61 = vmatpush.msra.mxu0 0.0
    %62 = vmatpush.msra.mxu0 0.0
    %63 = vmatpush.msra.mxu0 0.0
    %64 = vmatpush.msra.mxu0 0.0
    %65 = vmatpush.msra.mxu0 0.0
    %66 = vmatpush.msra.mxu0 0.0
    %67 = vmatpush.msra.mxu0 0.0
    %68 = vmatpush.msra.mxu0 %v51
    %69 = vmatmul.f32.gmra.mxu0 %v44
    %v70 = vpop.f32.mrf.mxu0
    %v71 = vadd.f32 %v35, %v70
    %72 = vmatmul.f32.gmra.mxu0 %v47
    %v73 = vpop.f32.mrf.mxu0
    %v74 = vadd.f32 %v40, %v73
    %75 = vdwg.mxu0
    %v76 = vmul.f32 %v71, 0.5
    %v77 = vmul.f32 %v74, 0.5
    %v78 = vtanh.pop %v76
    %v79 = vtanh.pop %v77
    %v80 = vmul.f32 %v78, 0.5
    %v81 = vmul.f32 %v79, 0.5
    %v82 = vadd.f32 %v80, 0.5
    %v83 = vadd.f32 %v81, 0.5
    %v84 = vld [vmem:[%s3] sm:$0xff]
    %v85 = vld [vmem:[%s3 + $0x8] sm:$0x3]
    %v86 = vld [vmem:[%s4] sm:$0xff]
    %v87 = vld [vmem:[%s4 + $0x8] sm:$0x3]
    %89 = vset.pattern.permute.xlu0 0
    %90 = vperm.xlu0 %89, %v86
    %v91 = vpop.permute.xlu0 %90
    %94 = vset.pattern.permute.xlu0 0
    %95 = vperm.xlu0 %94, %v87
    %v96 = vpop.permute.xlu0 %95
    %vm98 = vcmask 80896
    %v100 = vsel %vm98, %v84, 0
    %v103 = vsel %vm98, %v85, 0
    %vm105 = vcmask 1041408
    %v107 = vsel %vm105, %v83, 0
    %109 = vmatpush.msra.mxu0 0.0
    %110 = vmatpush.msra.mxu0 0.0
    %111 = vmatpush.msra.mxu0 0.0
    %112 = vmatpush.msra.mxu0 0.0
    %113 = vmatpush.msra.mxu0 0.0
    %114 = vmatpush.msra.mxu0 0.0
    %115 = vmatpush.msra.mxu0 0.0
    %116 = vmatpush.msra.mxu0 0.0
    %117 = vmatpush.msra.mxu0 0.0
    %118 = vmatpush.msra.mxu0 0.0
    %119 = vmatpush.msra.mxu0 0.0
    %120 = vmatpush.msra.mxu0 0.0
    %121 = vmatpush.msra.mxu0 0.0
    %122 = vmatpush.msra.mxu0 0.0
    %123 = vmatpush.msra.mxu0 %v107
    %124 = vmatpush.msra.mxu0 %v82
    %125 = vmatmul.f32.gmra.mxu0 %v100
    %v126 = vpop.f32.mrf.mxu0
    %v127 = vadd.f32 %v91, %v126
    %128 = vmatmul.f32.gmra.mxu0 %v103
    %v129 = vpop.f32.mrf.mxu0
    %v130 = vadd.f32 %v96, %v129
    %131 = vdwg.mxu0
    %v132 = vmul.f32 %v127, 0.5
    %v133 = vmul.f32 %v130, 0.5
    %v134 = vtanh.pop %v132
    %v135 = vtanh.pop %v133
    %v136 = vmul.f32 %v134, 0.5
    %v137 = vmul.f32 %v135, 0.5
    %v138 = vadd.f32 %v136, 0.5
    %v139 = vadd.f32 %v137, 0.5
    %v140 = vld [vmem:[%s5] sm:$0x3]
    %v141 = vld [vmem:[%s6] sm:$0x3]
    %143 = vset.pattern.permute.xlu0 0
    %144 = vperm.xlu0 %143, %v141
    %v145 = vpop.permute.xlu0 %144
    %v148 = vsel %vm98, %v140, 0
    %v151 = vsel %vm105, %v139, 0
    %153 = vmatpush.msra.mxu0 0.0
    %154 = vmatpush.msra.mxu0 0.0
    %155 = vmatpush.msra.mxu0 0.0
    %156 = vmatpush.msra.mxu0 0.0
    %157 = vmatpush.msra.mxu0 0.0
    %158 = vmatpush.msra.mxu0 0.0
    %159 = vmatpush.msra.mxu0 0.0
    %160 = vmatpush.msra.mxu0 0.0
    %161 = vmatpush.msra.mxu0 0.0
    %162 = vmatpush.msra.mxu0 0.0
    %163 = vmatpush.msra.mxu0 0.0
    %164 = vmatpush.msra.mxu0 0.0
    %165 = vmatpush.msra.mxu0 0.0
    %166 = vmatpush.msra.mxu0 0.0
    %167 = vmatpush.msra.mxu0 %v151
    %168 = vmatpush.msra.mxu0 %v138
    %169 = vmatmul.f32.gmra.mxu0 %v148
    %v170 = vpop.f32.mrf.mxu0
    %v171 = vadd.f32 %v145, %v170
    %172 = vdwg.mxu0
    %v173 = vmul.f32 %v171, 0.5
    %v174 = vtanh.pop %v173
    %v175 = vmul.f32 %v174, 0.5
    %v176 = vadd.f32 %v175, 0.5
    %vm177 = vcmask 58368
    %178 = vst.msk [vmem:[#allocation2] sm:$0x3] %vm177, %v176
    // Predicated region
    $region30: #{tpu_custom_call.1} parent=1 // pred_check
      _
    $region31: #{tpu_custom_call.1} parent=1 // pred_check_branch
      %180 = sbr.rel (0) target = $region33
    $region32: #{tpu_custom_call.1} parent=1 // pred_region
      %182 = vsyncadd [#allocation3], 0
      %s184 = sshll.u32 [#allocation2], 4
      %s185 = int_to_ptr.vmem [resolvable:$true] %s184
      %s186 = sshll.u32 %s7, 4
      %s187 = int_to_ptr.hbm [resolvable:$true] %s186
      %189 = dma.vmem_to_hbm [thread:$0]  %s185, 32, %s187, [#allocation3]
    $region33: #{tpu_custom_call.1} parent=1 // pred_fallthru
      _
    // Predicated region
    $region34: #{tpu_custom_call.1} parent=1 // pred_check
      _
    $region35: #{tpu_custom_call.1} parent=1 // pred_check_branch
      %191 = sbr.rel (0) target = $region37
    $region36: #{tpu_custom_call.1} parent=1 // pred_region
      %193 = dma.done [#allocation3], 32
    $region37: #{tpu_custom_call.1} parent=1 // pred_fallthru
      _
    %194 = vsyncpa [#allocation3], 1

</llo_original>
